<compile_context>
chip_gen: v7x
topology: tpu7x:2x2x1
jax: 0.10.0
libtpu: 0.0.40
codegen_flags: <defaults>
</compile_context>

<pallas_src>
import functools

import numpy as np
import jax
import jax.numpy as jnp
from jax import lax
from jax.experimental import pallas as pl
from jax.experimental.pallas import tpu as pltpu

EPS = 1e-8        # module-level `eps` in loss.py
COS_EPS = 1e-8    # torch.cosine_similarity default eps
_LANE = 128


def _pad_lanes(n):
    return max(_LANE, ((n + _LANE - 1) // _LANE) * _LANE)


# ----------------------------------------------------------------------------
# Kernels
# ----------------------------------------------------------------------------
def _l1_kernel(yp_ref, y_ref, out_ref, *, inv_size):
    # F.l1_loss: mean |y_pred - y|.  Inputs are lane-dense (1, Np), zero-padded
    # (pads contribute 0 to the sum); divide-by-size folded into a constant mul.
    d = jnp.abs(yp_ref[...] - y_ref[...])
    out_ref[0, 0] = jnp.sum(d) * inv_size


def _l2_kernel(yp_ref, y_ref, out_ref, *, inv_size):
    # F.mse_loss: mean (y_pred - y)^2.
    d = yp_ref[...] - y_ref[...]
    out_ref[0, 0] = jnp.sum(d * d) * inv_size


def _norm_in_norm_kernel(x_ref, out_ref, *, n, n_pad, inv_scale_sq):
    # norm_loss_with_normalization with defaults: alpha=[1,1], p=2, q=2,
    # detach=False, exponent=True.
    # x_ref: (2, n_pad) f32, row 0 = y_pred, row 1 = y, zero-padded past n.
    x = x_ref[...]
    inv_n = 1.0 / float(n)

    # valid-lane mask (pads are zero on input but must stay zero after centering)
    lane = lax.broadcasted_iota(jnp.int32, (1, n_pad), 1)
    mask = (lane < n).astype(jnp.float32)

    # --- pass 1: means of y_pred and y (one fused lane reduction) ---
    sums = jnp.sum(x, axis=-1, keepdims=True)            # (2, 1)
    xc = (x - sums * inv_n) * mask                       # centered, pads zeroed

    # --- pass 2: S_pp, S_yy, S_py in a single (3, n_pad) lane reduction ---
    sq = xc * xc                                          # (2, n_pad)
    cross = xc[0:1, :] * xc[1:2, :]                       # (1, n_pad)
    s2 = jnp.sum(jnp.concatenate([sq, cross], axis=0), axis=-1, keepdims=True)
    s_pp = s2[0, 0]                                       # sum (yp - m_hat)^2
    s_yy = s2[1, 0]                                       # sum (y  - m_y )^2
    s_py = s2[2, 0]                                       # sum centered cross

    inv_norm_p = 1.0 / (EPS + jnp.sqrt(s_pp))             # torch.norm(., p=2) + eps
    inv_norm_y = 1.0 / (EPS + jnp.sqrt(s_yy))

    # normalized-vector scalar moments (no normalized vectors materialized
    # except for rho below)
    a = s_pp * (inv_norm_p * inv_norm_p)                  # sum yp_n^2   (~1)
    b = s_yy * (inv_norm_y * inv_norm_y)                  # sum y_n^2    (~1)
    c = s_py * (inv_norm_p * inv_norm_y)                  # sum yp_n*y_n

    # loss0 = (||yp_n - y_n||_2 / scale)^2 = (a + b - 2c) / scale^2
    loss0 = (a + b - 2.0 * c) * inv_scale_sq

    # rho = cosine_similarity on length-1 rows: w1*w2 == w12^2, so
    # rho = w12 * rsqrt(max(w12^2, eps^2)).  Padded lanes give w12 = 0 -> rho = 0.
    w12 = cross * (inv_norm_p * inv_norm_y)               # (1, n_pad) = yp_n*y_n
    rho = w12 * lax.rsqrt(jnp.maximum(w12 * w12, COS_EPS * COS_EPS))

    # --- pass 3: sum rho, sum rho^2 in one (2, n_pad) lane reduction ---
    s3 = jnp.sum(jnp.concatenate([rho, rho * rho], axis=0),
                 axis=-1, keepdims=True)
    s_r = s3[0, 0]
    s_rr = s3[1, 0]

    # loss1: closed-form Frobenius expansion of err[i,j] = rho_j*yp_n_i - y_n_i
    #   sum_ij err^2 = (sum rho^2)*a - 2*(sum rho)*c + N*b
    loss1 = (s_rr * a - 2.0 * s_r * c + float(n) * b) * inv_scale_sq

    # alpha = [1, 1]
    out_ref[0, 0] = 0.5 * (loss0 + loss1)


# ----------------------------------------------------------------------------
# pallas_call wrapper (single program, full arrays resident in VMEM)
# ----------------------------------------------------------------------------
def _scalar_call(kernel, args):
    out = pl.pallas_call(
        kernel,
        out_shape=jax.ShapeDtypeStruct((1, 1), jnp.float32),
        in_specs=[pl.BlockSpec(memory_space=pltpu.MemorySpace.VMEM)] * len(args),
        out_specs=pl.BlockSpec(memory_space=pltpu.MemorySpace.SMEM),
    )(*args)
    return out[0, 0]


def _elementwise_loss(y_pred, y, which):
    size = int(np.prod(y_pred.shape))
    n_pad = _pad_lanes(size)
    yp = jnp.reshape(y_pred.astype(jnp.float32), (1, size))
    yy = jnp.reshape(y.astype(jnp.float32), (1, size))
    if n_pad != size:
        pad = ((0, 0), (0, n_pad - size))
        yp = jnp.pad(yp, pad)
        yy = jnp.pad(yy, pad)
    kern = _l1_kernel if which == 'l1' else _l2_kernel
    kernel = functools.partial(kern, inv_size=1.0 / float(size))
    return _scalar_call(kernel, (yp, yy))


def norm_loss_with_normalization(y_pred, y):
    """Defaults of the PyTorch helper: alpha=[1,1], p=2, q=2, detach=False, exponent=True."""
    n = int(y_pred.shape[0])
    if n <= 1:
        # torch branch: F.l1_loss(y_pred, y_pred.detach()) == 0
        return jnp.float32(0.0)
    p = q = 2.0
    scale = float(np.power(2.0, max(1.0, 1.0 / q)) *
                  np.power(float(n), max(0.0, 1.0 / p - 1.0 / q)))
    n_pad = _pad_lanes(n)
    # single lane-dense slab: row 0 = y_pred, row 1 = y, zero-padded lanes
    x = jnp.concatenate([jnp.reshape(y_pred.astype(jnp.float32), (1, n)),
                         jnp.reshape(y.astype(jnp.float32), (1, n))], axis=0)
    if n_pad != n:
        x = jnp.pad(x, ((0, 0), (0, n_pad - n)))
    kernel = functools.partial(_norm_in_norm_kernel, n=n, n_pad=n_pad,
                               inv_scale_sq=1.0 / (scale * scale))
    return _scalar_call(kernel, (x,))


@functools.partial(jax.jit, static_argnames=("loss_type",))
def _iqa_loss(y_pred, y, loss_type):
    y_pred = jnp.asarray(y_pred, jnp.float32)
    y = jnp.asarray(y, jnp.float32)
    if loss_type == 'l1':
        return _elementwise_loss(y_pred, y, 'l1')
    elif loss_type == 'l2':
        return _elementwise_loss(y_pred, y, 'l2')
    elif loss_type == 'norm-in-norm':
        return norm_loss_with_normalization(y_pred, y)
    else:
        raise ValueError


class IQALoss:
    """JAX/Pallas port of LRDB-hydra srcs/model/loss.py::IQALoss (forward only)."""

    def __init__(self, loss_type):
        if loss_type not in ('l1', 'l2', 'norm-in-norm'):
            raise ValueError
        self.loss_type = loss_type

    def __call__(self, y_pred, y):
        return _iqa_loss(jnp.asarray(y_pred, jnp.float32),
                         jnp.asarray(y, jnp.float32), self.loss_type)


# ----------------------------------------------------------------------------
# Pure-JAX references (mirror the PyTorch math) for a correctness check.
# ----------------------------------------------------------------------------
def _ref_norm_in_norm(yp, yy):
    n = yp.shape[0]
    yp = yp - jnp.mean(yp)
    yp = yp / (EPS + jnp.sqrt(jnp.sum(yp * yp)))
    yy = yy - jnp.mean(yy)
    yy = yy / (EPS + jnp.sqrt(jnp.sum(yy * yy)))
    scale = float(np.power(2.0, 1.0) * np.power(float(n), 0.0))   # = 2 for p=q=2
    loss0 = (jnp.sqrt(jnp.sum((yp - yy) ** 2)) / scale) ** 2
    rho = jnp.sum(yp * yy, axis=1) / jnp.sqrt(
        jnp.maximum(jnp.sum(yp * yp, axis=1) * jnp.sum(yy * yy, axis=1),
                    COS_EPS * COS_EPS))
    err = rho * yp - yy            # same (N,) * (N,1) -> (N,N) broadcast as torch
    loss1 = (jnp.sqrt(jnp.sum(err * err)) / scale) ** 2
    return (loss0 + loss1) / 2.0


if __name__ == "__main__":
    key = jax.random.PRNGKey(0)
    k1, k2, k3, k4 = jax.random.split(key, 4)

    # (N, 1) per-image quality scores (y_pred = model output, y = MOS labels)
    N = 8
    y_pred = jax.random.normal(k1, (N, 1), jnp.float32) * 2.0 + 3.0
    y = jax.random.normal(k2, (N, 1), jnp.float32) * 2.0 + 3.0

    out_l1 = jax.block_until_ready(IQALoss('l1')(y_pred, y))
    out_l2 = jax.block_until_ready(IQALoss('l2')(y_pred, y))
    out_nin = jax.block_until_ready(IQALoss('norm-in-norm')(y_pred, y))

    ref_l1 = jnp.mean(jnp.abs(y_pred - y))
    ref_l2 = jnp.mean((y_pred - y) ** 2)
    ref_nin = _ref_norm_in_norm(y_pred, y)

    np.testing.assert_allclose(np.asarray(out_l1), np.asarray(ref_l1),
                               rtol=1e-5, atol=1e-6)
    np.testing.assert_allclose(np.asarray(out_l2), np.asarray(ref_l2),
                               rtol=1e-5, atol=1e-6)
    np.testing.assert_allclose(np.asarray(out_nin), np.asarray(ref_nin),
                               rtol=1e-5, atol=1e-6)

    # second size crossing the 128-lane boundary (exercises the pad/mask path)
    N2 = 130
    y_pred2 = jax.random.normal(k3, (N2, 1), jnp.float32) * 2.0 + 3.0
    y2 = jax.random.normal(k4, (N2, 1), jnp.float32) * 2.0 + 3.0
    out_nin2 = jax.block_until_ready(IQALoss('norm-in-norm')(y_pred2, y2))
    ref_nin2 = _ref_norm_in_norm(y_pred2, y2)
    np.testing.assert_allclose(np.asarray(out_nin2), np.asarray(ref_nin2),
                               rtol=5e-5, atol=1e-4)

    print("KERNEL_OK")
</pallas_src>

<mosaic_0001>
module attributes {stable_mosaic.version = 11 : i64} {
  func.func @_l1_kernel(%arg0: memref<1x128xf32, #tpu.memory_space<vmem>>, %arg1: memref<1x128xf32, #tpu.memory_space<vmem>>, %arg2: memref<1x1xf32, #tpu.memory_space<smem>>) attributes {dimension_semantics = [], scalar_prefetch = 0 : i64, scratch_operands = 0 : i64, tpu.core_type = #tpu.core_type<tc>} {
    %c0 = arith.constant 0 : index
    %c0_0 = arith.constant 0 : index
    %0 = vector.load %arg0[%c0, %c0_0] : memref<1x128xf32, #tpu.memory_space<vmem>>, vector<1x128xf32>
    %c0_1 = arith.constant 0 : index
    %c0_2 = arith.constant 0 : index
    %1 = vector.load %arg1[%c0_1, %c0_2] : memref<1x128xf32, #tpu.memory_space<vmem>>, vector<1x128xf32>
    %2 = arith.subf %0, %1 : vector<1x128xf32>
    %3 = math.absf %2 : vector<1x128xf32>
    %4 = vector.shape_cast %3 : vector<1x128xf32> to vector<1x1x128xf32>
    %cst = arith.constant dense<0.000000e+00> : vector<1xf32>
    %5 = vector.multi_reduction <add>, %4, %cst [1, 2] : vector<1x1x128xf32> to vector<1xf32>
    %6 = vector.shape_cast %5 : vector<1xf32> to vector<1x1x1xf32>
    %7 = vector.extract %6[0, 0, 0] : f32 from vector<1x1x1xf32>
    %cst_3 = arith.constant 1.250000e-01 : f32
    %8 = arith.mulf %7, %cst_3 : f32
    %c0_4 = arith.constant 0 : index
    %c0_5 = arith.constant 0 : index
    %9 = memref.load %arg2[%c0_4, %c0_5] : memref<1x1xf32, #tpu.memory_space<smem>>
    memref.store %8, %arg2[%c0_4, %c0_5] : memref<1x1xf32, #tpu.memory_space<smem>>
    return
  }
}

</mosaic_0001>

<llo_original>
// kernel: _iqa_loss.1
$region0: #{_iqa_loss.1}
  #allocation0 [shape = 'u32[]', space=smem, size = 0x4, offset = 0x4, fixed_abs, tag = 'smem constant byte address 0x4 - core index']
  #allocation1 [shape = 'u32[144,128]{1,0:T(1,128)}', space=vmem, size = 0x12000, scoped, tag = 'internal scratch']
  %s0 = inlined_call_operand.vmem [shape: f32[1,128], index: 0, kind: input, shape index: {}]
  %s1 = inlined_call_operand.vmem [shape: f32[1,128], index: 1, kind: input, shape index: {}]
  %s2 = inlined_call_operand.hbm [shape: f32[1,1], index: 2, kind: output, shape index: {}]
  %s3 = sld [smem:[#allocation0]]
  $region18: #{_iqa_loss.1} parent=0
    _
  %s5 = ssub.s32 1, %s3
  %s6 = scalar_select 0, %s5, %s3
  $region1: #{_iqa_loss.1} parent=0
    #allocation2 [shape = 'u8[512]{0}', space=smem, size = 0x200, scoped, tag = 'output window, operand 0, single buffered']
    #allocation3 [shape = 's32[1]{0}', space=sflag, size = 0x4, scoped, tag = 'scoped memory for _iqa_loss.1']
    %7 = vsyncpa [#allocation3], 0
    // Predicated region
    $region2: #{_iqa_loss.1} parent=1 // pred_check
      _
    $region3: #{_iqa_loss.1} parent=1 // pred_check_branch
      %9 = sbr.rel (0) target = $region5
    $region4: #{_iqa_loss.1} parent=1 // pred_region
      _
    $region5: #{_iqa_loss.1} parent=1 // pred_fallthru
      _
    // Predicated region
    $region6: #{_iqa_loss.1} parent=1 // pred_check
      _
    $region7: #{_iqa_loss.1} parent=1 // pred_check_branch
      %11 = sbr.rel (0) target = $region9
    $region8: #{_iqa_loss.1} parent=1 // pred_region
      _
    $region9: #{_iqa_loss.1} parent=1 // pred_fallthru
      _
    %v12 = vld [vmem:[%s0] sm:$0x1]
    %v13 = vld [vmem:[%s1] sm:$0x1]
    %v14 = vsub.f32 %v12, %v13
    %v15 = vand.u32 2147483647, %v14
    %vm16 = vcmask 1040384
    %v17 = vsel %vm16, %v15, 0.0
    %18 = vadd.xlane.f32.xlu0 %v17
    %v19 = vpop.xlane.xlu0 %18
    %v20 = vrot.slane %v19, 4
    %v21 = vadd.f32 %v19, %v20
    %v22 = vrot.slane %v21, 2
    %v23 = vadd.f32 %v21, %v22
    %v24 = vrot.slane %v23, 1
    %v25 = vadd.f32 %v23, %v24
    %s26 = vtos %v25
    %s27 = smul.f32 %s26, 0.125
    %s28 = scalar_lea.smem [#allocation2], 0
    %29 = sst [smem:[%s28]] %s27
    // Predicated region
    $region10: #{_iqa_loss.1} parent=1 // pred_check
      _
    $region11: #{_iqa_loss.1} parent=1 // pred_check_branch
      %31 = sbr.rel (0) target = $region13
    $region12: #{_iqa_loss.1} parent=1 // pred_region
      %s33 = ssub.s32 16, 16
      %34 = vsyncadd [#allocation3], %s33
      %37 = dma.smem_to_hbm [#allocation2], 16, %s2, [#allocation3]
    $region13: #{_iqa_loss.1} parent=1 // pred_fallthru
      _
    // Predicated region
    $region14: #{_iqa_loss.1} parent=1 // pred_check
      _
    $region15: #{_iqa_loss.1} parent=1 // pred_check_branch
      %39 = sbr.rel (0) target = $region17
    $region16: #{_iqa_loss.1} parent=1 // pred_region
      %40 = dma.done [#allocation3], 16
    $region17: #{_iqa_loss.1} parent=1 // pred_fallthru
      _
    %41 = sfence
    %42 = vsyncpa [#allocation3], 1

</llo_original>
